<compile_context>
chip_gen: v7x
topology: tpu7x:2x2x1
jax: 0.10.0
libtpu: 0.0.40
codegen_flags: <defaults>
</compile_context>

<pallas_src>
import functools
import math

import jax
import jax.numpy as jnp
import numpy as np
from jax.experimental import pallas as pl
from jax.experimental.pallas import tpu as pltpu


# ----------------------------------------------------------------------------
# Kernel
# ----------------------------------------------------------------------------
def _control_unit_kernel(*refs, use_prior: bool, matmul_dtype):
    if use_prior:
        (pre_control_ref, question_ref, context_ref, mask_ref,
         w_cq_ref, b_cq_ref, w_score_ref,
         control_ref, scores_ref) = refs
        # control_question = Linear_{2D->D}(cat([pre_control, question], 1))
        # fused as a single (TB, 2D) @ (2D, D) MXU call with the unsplit weight.
        cq_in = jnp.concatenate([pre_control_ref[...], question_ref[...]], axis=-1)
        control_question = (
            jnp.dot(cq_in.astype(matmul_dtype),
                    w_cq_ref[...].astype(matmul_dtype),
                    preferred_element_type=jnp.float32)
            + b_cq_ref[...]
        )
    else:
        (question_ref, context_ref, mask_ref,
         w_score_ref,
         control_ref, scores_ref) = refs
        control_question = question_ref[...].astype(jnp.float32)

    context = context_ref[...].astype(jnp.float32)   # (TB, S, D)
    mask = mask_ref[...].astype(jnp.float32)         # (TB, S)

    # scores[b, s] = Linear_{D->1}(context[b, s] * cq[b])
    #             = sum_d context[b, s, d] * (cq[b, d] * w_score[d])  (+ b_score)
    # The score bias is a per-row constant: exp(s + b - max(s + b)) == exp(s - max(s)),
    # so it is omitted from the kernel with zero numerical effect on either output.
    scaled_cq = control_question * w_score_ref[...]              # (TB, D)
    scores = jnp.sum(context * scaled_cq[:, None, :], axis=-1)   # (TB, S) lane reduce

    # shifted softmax over the step axis, with the mask applied after exp
    scores = jnp.exp(scores - jnp.max(scores, axis=1, keepdims=True)) * mask
    scores = scores * pl.reciprocal(
        jnp.sum(scores, axis=1, keepdims=True), approx=True)

    # control = sum_s context[:, s, :] * scores[:, s]   (sublane reduce)
    control = jnp.sum(context * scores[:, :, None], axis=1)      # (TB, D)

    control_ref[...] = control.astype(control_ref.dtype)
    scores_ref[...] = scores.astype(scores_ref.dtype)


# ----------------------------------------------------------------------------
# Wrapper
# ----------------------------------------------------------------------------
def _pick_batch_tile(B, max_tile):
    """Batch tile: B itself if small, else a multiple-of-8 divisor of B <= max_tile."""
    if B <= max_tile:
        return B
    tb = max_tile - (max_tile % 8)
    while tb >= 8:
        if B % tb == 0:
            return tb
        tb -= 8
    return B


def control_unit_forward(pre_control, question, context, mask, params, *,
                         use_prior_control=True,
                         matmul_dtype=jnp.float32,   # jnp.bfloat16 recommended on v6e/v7x
                         max_batch_tile=128):        # sized for v7x's 64 MiB VMEM
    """Pallas implementation of ControlUnit.forward.

    pre_control, question : (B, D) float32
    context               : (B, S, D) float32
    mask                  : (B, S) float32
    returns (control (B, D), scores (B, S))
    """
    B, S, D = context.shape
    assert question.shape == (B, D)
    assert mask.shape == (B, S)

    TB = _pick_batch_tile(B, max_batch_tile)
    assert B % TB == 0, "batch must be divisible by the chosen batch tile"
    grid = (B // TB,)

    # streamed per batch tile
    vec_spec = lambda: pl.BlockSpec((TB, D), lambda i: (i, 0))
    ctx_spec = pl.BlockSpec((TB, S, D), lambda i: (i, 0, 0))
    mask_spec = pl.BlockSpec((TB, S), lambda i: (i, 0))
    # resident weights: same block every grid step -> fetched once
    res_spec = lambda shape: pl.BlockSpec(shape, lambda i, _s=shape: (0,) * len(_s))

    if use_prior_control:
        assert pre_control.shape == (B, D)
        in_specs = [vec_spec(), vec_spec(), ctx_spec, mask_spec,
                    res_spec((2 * D, D)), res_spec((1, D)), res_spec((1, D))]
        args = (pre_control, question, context, mask,
                params["w_cq"], params["b_cq"], params["w_score"])
    else:
        # pre_control and the unused concat-linear params are not DMA'd at all
        in_specs = [vec_spec(), ctx_spec, mask_spec, res_spec((1, D))]
        args = (question, context, mask, params["w_score"])

    kernel = functools.partial(_control_unit_kernel,
                               use_prior=use_prior_control,
                               matmul_dtype=matmul_dtype)

    control, scores = pl.pallas_call(
        kernel,
        out_shape=(jax.ShapeDtypeStruct((B, D), jnp.float32),
                   jax.ShapeDtypeStruct((B, S), jnp.float32)),
        grid_spec=pltpu.PrefetchScalarGridSpec(
            num_scalar_prefetch=0,
            grid=grid,
            in_specs=in_specs,
            out_specs=[pl.BlockSpec((TB, D), lambda i: (i, 0)),
                       pl.BlockSpec((TB, S), lambda i: (i, 0))],
        ),
        compiler_params=pltpu.CompilerParams(
            dimension_semantics=("parallel",)),
    )(*args)
    return control, scores


# ----------------------------------------------------------------------------
# Deterministic parameter init (xavier-uniform weights, zero biases, as in
# init_modules(..., init='uniform'))
# ----------------------------------------------------------------------------
def _xavier_uniform(key, fan_in, fan_out, shape):
    bound = math.sqrt(6.0 / (fan_in + fan_out))
    return jax.random.uniform(key, shape, jnp.float32, -bound, bound)


def make_params(key, D):
    k_cq, k_score = jax.random.split(key, 2)
    return {
        # control_question_transformer: Linear(2D -> D); stored as (in, out) = W.T
        "w_cq": _xavier_uniform(k_cq, 2 * D, D, (2 * D, D)),
        "b_cq": jnp.zeros((1, D), jnp.float32),
        # score_transformer: Linear(D -> 1); weight stored as a (1, D) row vector
        "w_score": _xavier_uniform(k_score, D, 1, (1, D)),
        # bias exists in the module (zero-init); kept for the reference but omitted
        # from the kernel because the shifted softmax cancels it exactly.
        "b_score": jnp.zeros((1, 1), jnp.float32),
    }


# ----------------------------------------------------------------------------
# Pure-JAX reference (mirrors the PyTorch forward exactly)
# ----------------------------------------------------------------------------
def control_unit_reference(pre_control, question, context, mask, params, *,
                           use_prior_control=True):
    if use_prior_control:
        cq = (jnp.concatenate([pre_control, question], axis=1) @ params["w_cq"]
              + params["b_cq"])
    else:
        cq = question
    scores = (jnp.sum(context * cq[:, None, :] * params["w_score"][None, :, :],
                      axis=-1)
              + params["b_score"][0, 0])
    scores = jnp.exp(scores - jnp.max(scores, axis=1, keepdims=True)) * mask
    scores = scores / jnp.sum(scores, axis=1, keepdims=True)
    control = jnp.sum(context * scores[:, :, None], axis=1)
    return control, scores


# ----------------------------------------------------------------------------
if __name__ == "__main__":
    B, S, D = 2, 8, 32

    key = jax.random.PRNGKey(0)
    k_pc, k_q, k_ctx, k_par = jax.random.split(key, 4)
    pre_control = jax.random.normal(k_pc, (B, D), jnp.float32)
    question = jax.random.normal(k_q, (B, D), jnp.float32)
    context = jax.random.normal(k_ctx, (B, S, D), jnp.float32)
    # deterministic padding-style mask: row 0 keeps all 8 steps, row 1 keeps 5
    lengths = jnp.array([[S], [5]], jnp.int32)
    mask = (jnp.arange(S)[None, :] < lengths).astype(jnp.float32)
    params = make_params(k_par, D)

    for use_prior in (True, False):
        out_c, out_s = control_unit_forward(
            pre_control, question, context, mask, params,
            use_prior_control=use_prior)
        out_c, out_s = jax.block_until_ready((out_c, out_s))

        ref_c, ref_s = control_unit_reference(
            pre_control, question, context, mask, params,
            use_prior_control=use_prior)
        # tolerance relaxed vs. bit-exact f32 because the softmax denominator uses
        # the EUP approximate reciprocal (pl.reciprocal(..., approx=True)).
        np.testing.assert_allclose(np.asarray(out_c), np.asarray(ref_c),
                                   rtol=5e-3, atol=1e-4)
        np.testing.assert_allclose(np.asarray(out_s), np.asarray(ref_s),
                                   rtol=5e-3, atol=1e-4)

    print("KERNEL_OK")
</pallas_src>

<mosaic_0001>
module attributes {stable_mosaic.version = 11 : i64} {
  func.func @_control_unit_kernel(%arg0: i32, %arg1: memref<2x32xf32, #tpu.memory_space<vmem>>, %arg2: memref<2x32xf32, #tpu.memory_space<vmem>>, %arg3: memref<2x8x32xf32, #tpu.memory_space<vmem>>, %arg4: memref<2x8xf32, #tpu.memory_space<vmem>>, %arg5: memref<64x32xf32, #tpu.memory_space<vmem>>, %arg6: memref<1x32xf32, #tpu.memory_space<vmem>>, %arg7: memref<1x32xf32, #tpu.memory_space<vmem>>, %arg8: memref<2x32xf32, #tpu.memory_space<vmem>>, %arg9: memref<2x8xf32, #tpu.memory_space<vmem>>) attributes {dimension_semantics = [#tpu.dimension_semantics<parallel>], iteration_bounds = array<i64: 1>, scalar_prefetch = 0 : i64, scratch_operands = 0 : i64, tpu.core_type = #tpu.core_type<tc>, window_params = [{transform_indices = @transform_0, window_bounds = array<i64: 2, 32>}, {transform_indices = @transform_1, window_bounds = array<i64: 2, 32>}, {transform_indices = @transform_2, window_bounds = array<i64: 2, 8, 32>}, {transform_indices = @transform_3, window_bounds = array<i64: 2, 8>}, {pipeline_mode = #tpu.pipeline_mode<synchronous>, transform_indices = @transform_4, window_bounds = array<i64: 64, 32>}, {pipeline_mode = #tpu.pipeline_mode<synchronous>, transform_indices = @transform_5, window_bounds = array<i64: 1, 32>}, {pipeline_mode = #tpu.pipeline_mode<synchronous>, transform_indices = @transform_6, window_bounds = array<i64: 1, 32>}, {transform_indices = @transform_7, window_bounds = array<i64: 2, 32>}, {transform_indices = @transform_8, window_bounds = array<i64: 2, 8>}]} {
    %c0 = arith.constant 0 : index
    %c0_0 = arith.constant 0 : index
    %0 = vector.load %arg1[%c0, %c0_0] : memref<2x32xf32, #tpu.memory_space<vmem>>, vector<2x32xf32>
    %c0_1 = arith.constant 0 : index
    %c0_2 = arith.constant 0 : index
    %1 = vector.load %arg2[%c0_1, %c0_2] : memref<2x32xf32, #tpu.memory_space<vmem>>, vector<2x32xf32>
    %2 = tpu.concatenate %0, %1 in 1 : vector<2x32xf32>, vector<2x32xf32> -> vector<2x64xf32>
    %c0_3 = arith.constant 0 : index
    %c0_4 = arith.constant 0 : index
    %3 = vector.load %arg5[%c0_3, %c0_4] : memref<64x32xf32, #tpu.memory_space<vmem>>, vector<64x32xf32>
    %cst = arith.constant dense<0.000000e+00> : vector<2x32xf32>
    %4 = tpu.matmul %2, %3, %cst {dimension_numbers = #tpu.dot_dimension_numbers<[1], [0], [0], [1], [0, 0, 1, 1], [], []>} : vector<2x64xf32>, vector<64x32xf32>, vector<2x32xf32> -> vector<2x32xf32>
    %c0_5 = arith.constant 0 : index
    %c0_6 = arith.constant 0 : index
    %5 = vector.load %arg6[%c0_5, %c0_6] : memref<1x32xf32, #tpu.memory_space<vmem>>, vector<1x32xf32>
    %6 = vector.broadcast %5 : vector<1x32xf32> to vector<2x32xf32>
    %7 = arith.addf %4, %6 : vector<2x32xf32>
    %c0_7 = arith.constant 0 : index
    %c0_8 = arith.constant 0 : index
    %c0_9 = arith.constant 0 : index
    %8 = vector.load %arg3[%c0_7, %c0_8, %c0_9] : memref<2x8x32xf32, #tpu.memory_space<vmem>>, vector<2x8x32xf32>
    %c0_10 = arith.constant 0 : index
    %c0_11 = arith.constant 0 : index
    %9 = vector.load %arg4[%c0_10, %c0_11] : memref<2x8xf32, #tpu.memory_space<vmem>>, vector<2x8xf32>
    %c0_12 = arith.constant 0 : index
    %c0_13 = arith.constant 0 : index
    %10 = vector.load %arg7[%c0_12, %c0_13] : memref<1x32xf32, #tpu.memory_space<vmem>>, vector<1x32xf32>
    %11 = vector.broadcast %10 : vector<1x32xf32> to vector<2x32xf32>
    %12 = arith.mulf %7, %11 : vector<2x32xf32>
    %13 = vector.shape_cast %12 : vector<2x32xf32> to vector<2x1x32xf32>
    %14 = vector.broadcast %13 : vector<2x1x32xf32> to vector<2x8x32xf32>
    %15 = arith.mulf %8, %14 : vector<2x8x32xf32>
    %cst_14 = arith.constant dense<0.000000e+00> : vector<2x8xf32>
    %16 = vector.multi_reduction <add>, %15, %cst_14 [2] : vector<2x8x32xf32> to vector<2x8xf32>
    %cst_15 = arith.constant dense<0xFF800000> : vector<2xf32>
    %17 = vector.multi_reduction <maximumf>, %16, %cst_15 [1] : vector<2x8xf32> to vector<2xf32>
    %18 = vector.shape_cast %17 : vector<2xf32> to vector<2x1xf32>
    %19 = vector.broadcast %18 : vector<2x1xf32> to vector<2x8xf32>
    %20 = arith.subf %16, %19 : vector<2x8xf32>
    %21 = math.exp %20 : vector<2x8xf32>
    %22 = arith.mulf %21, %9 : vector<2x8xf32>
    %cst_16 = arith.constant dense<0.000000e+00> : vector<2xf32>
    %23 = vector.multi_reduction <add>, %22, %cst_16 [1] : vector<2x8xf32> to vector<2xf32>
    %24 = vector.shape_cast %23 : vector<2xf32> to vector<2x1xf32>
    %25 = tpu.reciprocal %24 {approx = true} : vector<2x1xf32> -> vector<2x1xf32>
    %26 = vector.broadcast %25 : vector<2x1xf32> to vector<2x8xf32>
    %27 = arith.mulf %22, %26 : vector<2x8xf32>
    %28 = vector.shape_cast %27 : vector<2x8xf32> to vector<2x8x1xf32>
    %29 = vector.broadcast %28 : vector<2x8x1xf32> to vector<2x8x32xf32>
    %30 = arith.mulf %8, %29 : vector<2x8x32xf32>
    %cst_17 = arith.constant dense<0.000000e+00> : vector<2x32xf32>
    %31 = vector.multi_reduction <add>, %30, %cst_17 [1] : vector<2x8x32xf32> to vector<2x32xf32>
    %c0_18 = arith.constant 0 : index
    %c0_19 = arith.constant 0 : index
    %32 = vector.load %arg8[%c0_18, %c0_19] : memref<2x32xf32, #tpu.memory_space<vmem>>, vector<2x32xf32>
    tpu.vector_store %arg8[%c0_18, %c0_19], %31 {strides = array<i32>} : memref<2x32xf32, #tpu.memory_space<vmem>>, vector<2x32xf32>,
    %c0_20 = arith.constant 0 : index
    %c0_21 = arith.constant 0 : index
    %33 = vector.load %arg9[%c0_20, %c0_21] : memref<2x8xf32, #tpu.memory_space<vmem>>, vector<2x8xf32>
    tpu.vector_store %arg9[%c0_20, %c0_21], %27 {strides = array<i32>} : memref<2x8xf32, #tpu.memory_space<vmem>>, vector<2x8xf32>,
    return
  }
  func.func @transform_0(%arg0: i32) -> (i32, i32) {
    %c0_i32 = arith.constant 0 : i32
    %c0_i32_0 = arith.constant 0 : i32
    return %arg0, %c0_i32 : i32, i32
  }
  func.func @transform_1(%arg0: i32) -> (i32, i32) {
    %c0_i32 = arith.constant 0 : i32
    %c0_i32_0 = arith.constant 0 : i32
    return %arg0, %c0_i32 : i32, i32
  }
  func.func @transform_2(%arg0: i32) -> (i32, i32, i32) {
    %c0_i32 = arith.constant 0 : i32
    %c0_i32_0 = arith.constant 0 : i32
    %c0_i32_1 = arith.constant 0 : i32
    return %arg0, %c0_i32, %c0_i32_0 : i32, i32, i32
  }
  func.func @transform_3(%arg0: i32) -> (i32, i32) {
    %c0_i32 = arith.constant 0 : i32
    %c0_i32_0 = arith.constant 0 : i32
    return %arg0, %c0_i32 : i32, i32
  }
  func.func @transform_4(%arg0: i32) -> (i32, i32) {
    %c0_i32 = arith.constant 0 : i32
    %c0_i32_0 = arith.constant 0 : i32
    %c0_i32_1 = arith.constant 0 : i32
    return %c0_i32, %c0_i32_0 : i32, i32
  }
  func.func @transform_5(%arg0: i32) -> (i32, i32) {
    %c0_i32 = arith.constant 0 : i32
    %c0_i32_0 = arith.constant 0 : i32
    %c0_i32_1 = arith.constant 0 : i32
    return %c0_i32, %c0_i32_0 : i32, i32
  }
  func.func @transform_6(%arg0: i32) -> (i32, i32) {
    %c0_i32 = arith.constant 0 : i32
    %c0_i32_0 = arith.constant 0 : i32
    %c0_i32_1 = arith.constant 0 : i32
    return %c0_i32, %c0_i32_0 : i32, i32
  }
  func.func @transform_7(%arg0: i32) -> (i32, i32) {
    %c0_i32 = arith.constant 0 : i32
    %c0_i32_0 = arith.constant 0 : i32
    return %arg0, %c0_i32 : i32, i32
  }
  func.func @transform_8(%arg0: i32) -> (i32, i32) {
    %c0_i32 = arith.constant 0 : i32
    %c0_i32_0 = arith.constant 0 : i32
    return %arg0, %c0_i32 : i32, i32
  }
}

</mosaic_0001>

<llo_original>
// kernel: tpu_custom_call.1
$region0: #{tpu_custom_call.1}
  #allocation0 [shape = 'u32[]', space=smem, size = 0x4, offset = 0x4, fixed_abs, tag = 'smem constant byte address 0x4 - core index']
  #allocation1 [shape = 'u32[144,128]{1,0:T(1,128)}', space=vmem, size = 0x12000, scoped, tag = 'internal scratch']
  %s0 = inlined_call_operand.vmem [shape: f32[2,32], index: 0, kind: input, shape index: {}]
  %s1 = inlined_call_operand.vmem [shape: f32[2,32], index: 1, kind: input, shape index: {}]
  %s2 = inlined_call_operand.vmem [shape: f32[2,8,32], index: 2, kind: input, shape index: {}]
  %s3 = inlined_call_operand.vmem [shape: f32[2,8], index: 3, kind: input, shape index: {}]
  %s4 = inlined_call_operand.vmem [shape: f32[64,32], index: 4, kind: input, shape index: {}]
  %s5 = inlined_call_operand.vmem [shape: f32[1,32], index: 5, kind: input, shape index: {}]
  %s6 = inlined_call_operand.vmem [shape: f32[1,32], index: 6, kind: input, shape index: {}]
  %s7 = inlined_call_operand.hbm [shape: f32[2,32], index: 7, kind: output, shape index: {0}]
  %s8 = inlined_call_operand.hbm [shape: f32[2,8], index: 8, kind: output, shape index: {1}]
  %9 = xla_tuple %s7, %s8
  %s10 = sld [smem:[#allocation0]]
  $region46: #{tpu_custom_call.1} parent=0
    _
  %s12 = ssub.s32 1, %s10
  %s13 = scalar_select 0, %s12, %s10
  $region1: #{tpu_custom_call.1} parent=0
    #allocation2 [shape = 'u8[1024]{0}', space=vmem, size = 0x400, scoped, tag = 'output window, operand 0, single buffered']
    #allocation3 [shape = 's32[1]{0}', space=sflag, size = 0x4, scoped, tag = 'scoped memory for tpu_custom_call.1']
    #allocation4 [shape = 'u8[1024]{0}', space=vmem, size = 0x400, scoped, tag = 'output window, operand 1, single buffered']
    #allocation5 [shape = 's32[1]{0}', space=sflag, size = 0x4, scoped, tag = 'scoped memory for tpu_custom_call.1']
    %14 = vsyncpa [#allocation3], 0
    %15 = vsyncpa [#allocation5], 0
    // Predicated region
    $region2: #{tpu_custom_call.1} parent=1 // pred_check
      _
    $region3: #{tpu_custom_call.1} parent=1 // pred_check_branch
      %17 = sbr.rel (0) target = $region5
    $region4: #{tpu_custom_call.1} parent=1 // pred_region
      _
    $region5: #{tpu_custom_call.1} parent=1 // pred_fallthru
      _
    // Predicated region
    $region6: #{tpu_custom_call.1} parent=1 // pred_check
      _
    $region7: #{tpu_custom_call.1} parent=1 // pred_check_branch
      %19 = sbr.rel (0) target = $region9
    $region8: #{tpu_custom_call.1} parent=1 // pred_region
      _
    $region9: #{tpu_custom_call.1} parent=1 // pred_fallthru
      _
    // Predicated region
    $region10: #{tpu_custom_call.1} parent=1 // pred_check
      _
    $region11: #{tpu_custom_call.1} parent=1 // pred_check_branch
      %21 = sbr.rel (0) target = $region13
    $region12: #{tpu_custom_call.1} parent=1 // pred_region
      _
    $region13: #{tpu_custom_call.1} parent=1 // pred_fallthru
      _
    // Predicated region
    $region14: #{tpu_custom_call.1} parent=1 // pred_check
      _
    $region15: #{tpu_custom_call.1} parent=1 // pred_check_branch
      %23 = sbr.rel (0) target = $region17
    $region16: #{tpu_custom_call.1} parent=1 // pred_region
      _
    $region17: #{tpu_custom_call.1} parent=1 // pred_fallthru
      _
    // Predicated region
    $region18: #{tpu_custom_call.1} parent=1 // pred_check
      _
    $region19: #{tpu_custom_call.1} parent=1 // pred_check_branch
      %25 = sbr.rel (0) target = $region21
    $region20: #{tpu_custom_call.1} parent=1 // pred_region
      _
    $region21: #{tpu_custom_call.1} parent=1 // pred_fallthru
      _
    // Predicated region
    $region22: #{tpu_custom_call.1} parent=1 // pred_check
      _
    $region23: #{tpu_custom_call.1} parent=1 // pred_check_branch
      %27 = sbr.rel (0) target = $region25
    $region24: #{tpu_custom_call.1} parent=1 // pred_region
      _
    $region25: #{tpu_custom_call.1} parent=1 // pred_fallthru
      _
    // Predicated region
    $region26: #{tpu_custom_call.1} parent=1 // pred_check
      _
    $region27: #{tpu_custom_call.1} parent=1 // pred_check_branch
      %29 = sbr.rel (0) target = $region29
    $region28: #{tpu_custom_call.1} parent=1 // pred_region
      _
    $region29: #{tpu_custom_call.1} parent=1 // pred_fallthru
      _
    %v30 = vld [vmem:[%s0] sm:$0x3]
    %v31 = vld [vmem:[%s1] sm:$0x3]
    %33 = vrot.lane.b32.xlu0 %v31, 32
    %v34 = vpop.permute.xlu0 %33
    %vm36 = vcmask 261120
    %v37 = vsel %vm36, %v30, %v34
    %v38 = vld [vmem:[%s4] sm:$0xff]
    %v39 = vld [vmem:[%s4 + $0x8] sm:$0xff]
    %v40 = vld [vmem:[%s4 + $0x10] sm:$0xff]
    %v41 = vld [vmem:[%s4 + $0x18] sm:$0xff]
    %v42 = vld [vmem:[%s4 + $0x20] sm:$0xff]
    %v43 = vld [vmem:[%s4 + $0x28] sm:$0xff]
    %v44 = vld [vmem:[%s4 + $0x30] sm:$0xff]
    %v45 = vld [vmem:[%s4 + $0x38] sm:$0xff]
    %v46 = vld [vmem:[%s5] sm:$0x1]
    %v48 = vlaneseq
    %v49 = vshrl.u32 %v48, 7
    %v50 = vsub.s32 0, %v49
    %v51 = vrot.slane %v46, %v50
    %vm53 = vcmask 523264
    %v55 = vsel %vm53, %v37, 0
    %57 = vmatprep.subr.mxu0 0.0
    %58 = vmatpush1.msra.mxu0 %v38
    %59 = vmatprep.subr.mxu0 0.0
    %60 = vmatpush1.msra.mxu0 %v39
    %61 = vmatprep.subr.mxu0 0.0
    %62 = vmatpush1.msra.mxu0 %v40
    %63 = vmatprep.subr.mxu0 0.0
    %64 = vmatpush1.msra.mxu0 %v41
    %65 = vmatprep.subr.mxu0 0.0
    %66 = vmatpush1.msra.mxu0 %v42
    %67 = vmatprep.subr.mxu0 0.0
    %68 = vmatpush1.msra.mxu0 %v43
    %69 = vmatprep.subr.mxu0 0.0
    %70 = vmatpush1.msra.mxu0 %v44
    %71 = vmatprep.subr.mxu0 0.0
    %72 = vmatpush1.msra.mxu0 %v45
    %73 = vmatprep.subr.mxu0 0.0
    %74 = vmatpush1.msra.mxu0 0.0
    %75 = vmatprep.subr.mxu0 0.0
    %76 = vmatpush1.msra.mxu0 0.0
    %77 = vmatprep.subr.mxu0 0.0
    %78 = vmatpush1.msra.mxu0 0.0
    %79 = vmatprep.subr.mxu0 0.0
    %80 = vmatpush1.msra.mxu0 0.0
    %81 = vmatprep.subr.mxu0 0.0
    %82 = vmatpush1.msra.mxu0 0.0
    %83 = vmatprep.subr.mxu0 0.0
    %84 = vmatpush1.msra.mxu0 0.0
    %85 = vmatprep.subr.mxu0 0.0
    %86 = vmatpush1.msra.mxu0 0.0
    %87 = vmatprep.subr.mxu0 0.0
    %88 = vmatpush1.msra.mxu0 0.0
    %89 = vmatprep.subr.mxu0 0.0
    %90 = vmatpush1.msra.mxu0 0.0
    %91 = vmatprep.subr.mxu0 0.0
    %92 = vmatpush1.msra.mxu0 0.0
    %93 = vmatprep.subr.mxu0 0.0
    %94 = vmatpush1.msra.mxu0 0.0
    %95 = vmatprep.subr.mxu0 0.0
    %96 = vmatpush1.msra.mxu0 0.0
    %97 = vmatprep.subr.mxu0 0.0
    %98 = vmatpush1.msra.mxu0 0.0
    %99 = vmatprep.subr.mxu0 0.0
    %100 = vmatpush1.msra.mxu0 0.0
    %101 = vmatprep.subr.mxu0 0.0
    %102 = vmatpush1.msra.mxu0 0.0
    %103 = vmatprep.subr.mxu0 0.0
    %104 = vmatpush1.msra.mxu0 0.0
    %105 = vmatprep.subr.mxu0 0.0
    %106 = vmatpush1.msra.mxu0 0.0
    %107 = vmatprep.subr.mxu0 0.0
    %108 = vmatpush1.msra.mxu0 0.0
    %109 = vmatprep.subr.mxu0 0.0
    %110 = vmatpush1.msra.mxu0 0.0
    %111 = vmatprep.subr.mxu0 0.0
    %112 = vmatpush1.msra.mxu0 0.0
    %113 = vmatprep.subr.mxu0 0.0
    %114 = vmatpush1.msra.mxu0 0.0
    %115 = vmatprep.subr.mxu0 0.0
    %116 = vmatpush1.msra.mxu0 0.0
    %117 = vmatprep.subr.mxu0 0.0
    %118 = vmatpush1.msra.mxu0 0.0
    %119 = vmatprep.subr.mxu0 0.0
    %120 = vmatpush1.msra.mxu0 0.0
    %121 = vmatprep.mubr.f32.mxu0 0.0
    %122 = vmatmul.mubr.f32.gmra.mrb[0].mxu0 %v55
    %v123 = vpop.f32.mrb[0].mxu0
    %v124 = vadd.f32 %v51, %v123
    %v125 = vpop.f32.mrb[0].mxu0
    %126 = vdwg.mxu0
    %v127 = vld [vmem:[%s2] sm:$0xff]
    %v128 = vld [vmem:[%s2 + $0x8] sm:$0xff]
    %v129 = vld [vmem:[%s3] sm:$0x3]
    %v130 = vld [vmem:[%s6] sm:$0x1]
    %v132 = vlaneseq
    %v133 = vshrl.u32 %v132, 7
    %v134 = vsub.s32 0, %v133
    %v135 = vrot.slane %v130, %v134
    %v137 = vmul.f32 %v124, %v135
    %v140 = vunpack.c.l.s4 1966171168
    %v141 = vunpack.c.0.s8 %v140
    %v142 = vlaneseq
    %v143 = vshrl.u32 %v142, 7
    %v144 = vsub.s32 %v141, %v143
    %v145 = vrot.slane %v137, %v144
    %v146 = vcombine.high %v145, %v145
    %v148 = vunpack.c.l.s4 1966171168
    %v149 = vunpack.c.0.s8 %v148
    %v150 = vlaneseq
    %v151 = vshrl.u32 %v150, 7
    %v152 = vsub.s32 %v149, %v151
    %v153 = vrot.slane %v145, %v152
    %v155 = vunpack.c.l.s4 1966171168
    %v156 = vunpack.c.0.s8 %v155
    %v157 = vlaneseq
    %v158 = vshrl.u32 %v157, 7
    %v159 = vsub.s32 %v156, %v158
    %v160 = vrot.slane %v146, %v159
    %v161 = vlaneseq
    %v162 = vshrl.u32 %v161, 7
    %v163 = vsub.s32 0, %v162
    %v164 = vrot.slane %v153, %v163
    %v165 = vlaneseq
    %v166 = vshrl.u32 %v165, 7
    %v167 = vsub.s32 0, %v166
    %v168 = vrot.slane %v160, %v167
    %v171 = vmul.f32 %v127, %v164
    %v172 = vmul.f32 %v128, %v168
    %v173 = vsel %vm36, %v171, 0.0
    %174 = vadd.xlane.f32.xlu0 %v173
    %v175 = vpop.xlane.xlu0 %174
    %v176 = vsel %vm36, %v172, 0.0
    %177 = vadd.xlane.f32.xlu0 %v176
    %v178 = vpop.xlane.xlu0 %177
    %v181 = vlaneseq
    %v182 = vand.u32 %v181, 127
    %v183 = vlaneseq
    %v184 = vshrl.u32 %v183, 7
    %v185 = vsub.s32 %v182, %v184
    %v186 = vrot.slane %v175, %v185
    %v187 = vlaneseq
    %v188 = vshrl.u32 %v187, 7
    %v189 = vsub.s32 %v182, %v188
    %v190 = vrot.slane %v178, %v189
    %vm191 = vcmask 1041409
    %v192 = vsel %vm191, %v190, %v186
    %vm194 = vcmask 58368
    %v195 = vsel %vm194, %v192, -inf
    %196 = vmax.xlane.f32.xlu0 %v195
    %v197 = vpop.xlane.xlu0 %196
    %v199 = vlaneseq
    %v200 = vshrl.u32 %v199, 7
    %v201 = vsub.s32 0, %v200
    %v202 = vrot.slane %v197, %v201
    %v203 = vlaneseq
    %v204 = vshrl.u32 %v203, 7
    %v205 = vsub.s32 1, %v204
    %v206 = vrot.slane %v197, %v205
    %v209 = vsub.f32 %v175, %v202
    %v210 = vsub.f32 %v178, %v206
    %v211 = vmul.f32 %v209, 1.442695
    %v212 = vpow.pop %v211
    %v213 = vmul.f32 %v210, 1.442695
    %v214 = vpow.pop %v213
    %v216 = vlaneseq
    %v217 = vshrl.u32 %v216, 7
    %v218 = vsub.s32 0, %v217
    %v219 = vrot.slane %v129, %v218
    %221 = vbcast.lane.b32.xlu0 %v219, 256
    %v222 = vpop.permute.xlu0 %221
    %v223 = vlaneseq
    %v224 = vshrl.u32 %v223, 7
    %v225 = vsub.s32 1, %v224
    %v226 = vrot.slane %v129, %v225
    %228 = vbcast.lane.b32.xlu0 %v226, 256
    %v229 = vpop.permute.xlu0 %228
    %v232 = vmul.f32 %v212, %v222
    %v233 = vmul.f32 %v214, %v229
    %236 = vset.pattern.permute.xlu0 0
    %237 = vperm.xlu0 %236, %v232
    %v238 = vpop.permute.xlu0 %237
    %239 = vset.pattern.permute.xlu0 0
    %240 = vperm.xlu0 %239, %v233
    %v241 = vpop.permute.xlu0 %240
    %v242 = vlaneseq
    %v243 = vshrl.u32 %v242, 7
    %v244 = vsub.s32 %v182, %v243
    %v245 = vrot.slane %v238, %v244
    %v246 = vlaneseq
    %v247 = vshrl.u32 %v246, 7
    %v248 = vsub.s32 %v182, %v247
    %v249 = vrot.slane %v241, %v248
    %v250 = vsel %vm191, %v249, %v245
    %v252 = vsel %vm194, %v250, 0.0
    %253 = vadd.xlane.f32.xlu0 %v252
    %v254 = vpop.xlane.xlu0 %253
    %v255 = vrcp.pop %v254
    %v257 = vlaneseq
    %v258 = vshrl.u32 %v257, 7
    %v259 = vsub.s32 0, %v258
    %v260 = vrot.slane %v255, %v259
    %v261 = vlaneseq
    %v262 = vshrl.u32 %v261, 7
    %v263 = vsub.s32 1, %v262
    %v264 = vrot.slane %v255, %v263
    %v267 = vmul.f32 %v232, %v260
    %v268 = vmul.f32 %v233, %v264
    %270 = vset.pattern.permute.xlu0 0
    %271 = vperm.xlu0 %270, %v267
    %v272 = vpop.permute.xlu0 %271
    %275 = vset.pattern.permute.xlu0 0
    %276 = vperm.xlu0 %275, %v268
    %v277 = vpop.permute.xlu0 %276
    %v279 = vmul.f32 %v127, %v272
    %v280 = vmul.f32 %v128, %v277
    %v281 = vsel %vm36, %v279, 0.0
    %v282 = vrot.slane %v281, 4
    %v283 = vadd.f32 %v281, %v282
    %v284 = vrot.slane %v283, 2
    %v285 = vadd.f32 %v283, %v284
    %v286 = vrot.slane %v285, 1
    %v287 = vadd.f32 %v285, %v286
    %v288 = vsel %vm36, %v280, 0.0
    %v289 = vrot.slane %v288, 4
    %v290 = vadd.f32 %v288, %v289
    %v291 = vrot.slane %v290, 2
    %v292 = vadd.f32 %v290, %v291
    %v293 = vrot.slane %v292, 1
    %v294 = vadd.f32 %v292, %v293
    %v297 = vsel %vm191, %v294, %v287
    %vm299 = vcmask 254976
    %300 = vst.msk [vmem:[#allocation2] sm:$0x3] %vm299, %v297
    %v301 = vlaneseq
    %v302 = vshrl.u32 %v301, 7
    %v303 = vsub.s32 %v182, %v302
    %v304 = vrot.slane %v272, %v303
    %v305 = vlaneseq
    %v306 = vshrl.u32 %v305, 7
    %v307 = vsub.s32 %v182, %v306
    %v308 = vrot.slane %v277, %v307
    %v309 = vsel %vm191, %v308, %v304
    %311 = vst.msk [vmem:[#allocation4] sm:$0x3] %vm194, %v309
    // Predicated region
    $region30: #{tpu_custom_call.1} parent=1 // pred_check
      _
    $region31: #{tpu_custom_call.1} parent=1 // pred_check_branch
      %313 = sbr.rel (0) target = $region33
    $region32: #{tpu_custom_call.1} parent=1 // pred_region
      %s315 = ssub.s32 32, 32
      %316 = vsyncadd [#allocation3], %s315
      %s318 = sshll.u32 [#allocation2], 4
      %s319 = int_to_ptr.vmem [resolvable:$true] %s318
      %321 = dma.vmem_to_hbm [thread:$0]  %s319, 32, %s7, [#allocation3]
    $region33: #{tpu_custom_call.1} parent=1 // pred_fallthru
      _
    // Predicated region
    $region34: #{tpu_custom_call.1} parent=1 // pred_check
      _
    $region35: #{tpu_custom_call.1} parent=1 // pred_check_branch
      %323 = sbr.rel (0) target = $region37
    $region36: #{tpu_custom_call.1} parent=1 // pred_region
      %s325 = ssub.s32 32, 32
      %326 = vsyncadd [#allocation5], %s325
      %s328 = sshll.u32 [#allocation4], 4
      %s329 = int_to_ptr.vmem [resolvable:$true] %s328
      %331 = dma.vmem_to_hbm [thread:$0]  %s329, 32, %s8, [#allocation5]
    $region37: #{tpu_custom_call.1} parent=1 // pred_fallthru
      _
    // Predicated region
    $region38: #{tpu_custom_call.1} parent=1 // pred_check
      _
    $region39: #{tpu_custom_call.1} parent=1 // pred_check_branch
      %333 = sbr.rel (0) target = $region41
    $region40: #{tpu_custom_call.1} parent=1 // pred_region
      %334 = dma.done [#allocation3], 32
    $region41: #{tpu_custom_call.1} parent=1 // pred_fallthru
      _
    // Predicated region
    $region42: #{tpu_custom_call.1} parent=1 // pred_check
      _
    $region43: #{tpu_custom_call.1} parent=1 // pred_check_branch
      %336 = sbr.rel (0) target = $region45
    $region44: #{tpu_custom_call.1} parent=1 // pred_region
      %337 = dma.done [#allocation5], 32
    $region45: #{tpu_custom_call.1} parent=1 // pred_fallthru
      _
    %338 = vsyncpa [#allocation3], 1
    %339 = vsyncpa [#allocation5], 1

</llo_original>
